<compile_context>
chip_gen: v7x
topology: tpu7x:2x2x1
jax: 0.10.0
libtpu: 0.0.40
codegen_flags: <defaults>
</compile_context>

<pallas_src>
import functools

import jax
import jax.numpy as jnp
from jax.experimental import pallas as pl
from jax.experimental.pallas import tpu as pltpu


LN_EPS = 1e-5  # PyTorch nn.LayerNorm default


def _default_vmem_limit():
    """Generation-aware scoped-VMEM budget (~3/4 of physical VMEM)."""
    try:
        cap = int(pltpu.get_tpu_info().vmem_capacity_bytes)
    except Exception:
        cap = 64 * 1024 * 1024  # conservative (v7x-sized) fallback
    # ~96 MiB on v5e/v6e (128 MiB physical), ~48 MiB on v7x (64 MiB physical).
    return min((cap * 3) // 4, 112 * 1024 * 1024)


def _pick_rows_per_tile(rows, bytes_per_row, resident_bytes, vmem_limit,
                        max_rows=8192, min_grid_steps=2):
    """Largest sublane-aligned row tile that fits the VMEM budget.

    bytes_per_row must include double-buffered I/O *and* the f32 intermediates
    the kernel keeps live per row; resident_bytes covers grid-invariant blocks.
    """
    if rows <= 8:
        return rows                                  # tiny array: one full tile
    budget = (vmem_limit * 7) // 8 - resident_bytes  # headroom for the compiler
    t = budget // max(int(bytes_per_row), 1)
    t = min(int(t), max_rows, rows)
    # Keep >= min_grid_steps grid steps so the "parallel" row axis can still be
    # sharded across v7x's two TensorCores (no-op on v5e/v6e).
    if rows // min_grid_steps >= 8:
        t = min(t, rows // min_grid_steps)
    return max(8, (t // 8) * 8)                      # multiple of 8 sublanes


def _const_spec(shape, index_map):
    """BlockSpec for a grid-invariant block: a single VMEM buffer is enough."""
    try:
        return pl.BlockSpec(shape, index_map, pipeline_mode=pl.Buffered(1))
    except Exception:  # pragma: no cover - older jax without pipeline_mode
        return pl.BlockSpec(shape, index_map)


def _compiler_params(vmem_limit_bytes, dims, allow_input_fusion=None):
    return pltpu.CompilerParams(
        dimension_semantics=dims,
        vmem_limit_bytes=vmem_limit_bytes,
        allow_input_fusion=allow_input_fusion,
    )


def _layernorm(add_f32, gamma, beta):
    # Two-pass mean/var (more stable than E[x^2]-mean^2 for un-normalized
    # activations); the XLU reductions are hidden under the HBM roofline.
    mean = jnp.mean(add_f32, axis=-1, keepdims=True)
    centered = add_f32 - mean
    var = jnp.mean(centered * centered, axis=-1, keepdims=True)  # biased var
    inv_std = jax.lax.rsqrt(var + LN_EPS)
    return centered * inv_std * gamma + beta


# --------------------------- kernel bodies ----------------------------------


def _addnorm_linear_kernel(x_ref, w_ref, b_ref, gamma_ref, beta_ref, o_ref,
                           *, precision):
    """Fused LayerNorm((x @ W + b) + x) for one row tile; W fully resident."""
    x = x_ref[...]                                            # (T, D), io dtype
    sub = jnp.dot(x, w_ref[...], preferred_element_type=jnp.float32,
                  precision=precision) + b_ref[...]
    add = sub + x.astype(jnp.float32)
    o_ref[...] = _layernorm(add, gamma_ref[...], beta_ref[...]).astype(o_ref.dtype)


def _addnorm_linear_ktiled_kernel(xk_ref, x_ref, w_ref, b_ref, gamma_ref,
                                  beta_ref, o_ref, acc_ref, *, precision):
    """Fused path with the matmul K-tiled over the inner grid axis (large D)."""
    k = pl.program_id(1)

    @pl.when(k == 0)
    def _init():
        acc_ref[...] = jnp.zeros_like(acc_ref)

    acc_ref[...] += jnp.dot(xk_ref[...], w_ref[...],
                            preferred_element_type=jnp.float32,
                            precision=precision)

    @pl.when(k == pl.num_programs(1) - 1)
    def _finalize():
        add = acc_ref[...] + b_ref[...] + x_ref[...].astype(jnp.float32)
        o_ref[...] = _layernorm(add, gamma_ref[...],
                                beta_ref[...]).astype(o_ref.dtype)


def _addnorm_kernel(x_ref, sub_ref, gamma_ref, beta_ref, o_ref):
    """Generic: LayerNorm(sub_out + x) for one row tile."""
    add = x_ref[...].astype(jnp.float32) + sub_ref[...].astype(jnp.float32)
    o_ref[...] = _layernorm(add, gamma_ref[...], beta_ref[...]).astype(o_ref.dtype)


# ------------------------------ wrappers -------------------------------------


def _pick_k_tile(D, k_tile):
    if k_tile is not None:
        if D % k_tile != 0:
            raise ValueError("k_tile must divide d_model")
        return k_tile
    if D > 512:
        # 256-aligned tiles keep the 256x256 v6e/v7x MXU full (and are fine on
        # v5e's 128x128 MXUs).
        for tk in (512, 256, 128):
            if D % tk == 0:
                return tk
    return D


def addnorm_linear_pallas(x, W, b, gamma, beta, *,
                          rows_per_tile=None, k_tile=None,
                          weight_dtype=jnp.bfloat16, precision=None,
                          vmem_limit_bytes=None):
    """LayerNorm((x @ W + b) + x) over the last dim. x: (B, S, D), W: (D, D)."""
    B, S, D = x.shape
    rows = B * S
    if vmem_limit_bytes is None:
        vmem_limit_bytes = _default_vmem_limit()

    x2 = x.reshape(rows, D)                       # keep input dtype (no f32 cast)
    # bf16 weights halve W's HBM fetch + VMEM residency; at DEFAULT precision the
    # MXU decomposes f32 into bf16 passes anyway.  Pass weight_dtype=W.dtype and
    # precision=jax.lax.Precision.HIGHEST for bit-closer f32 parity.
    W2 = W.astype(weight_dtype) if weight_dtype is not None else W
    b2 = b.reshape(1, D).astype(jnp.float32)
    g2 = gamma.reshape(1, D).astype(jnp.float32)
    be2 = beta.reshape(1, D).astype(jnp.float32)
    out_dtype = x.dtype

    tk = _pick_k_tile(D, k_tile)
    num_k = D // tk
    x_item = x.dtype.itemsize
    out_item = out_dtype.itemsize
    w_item = W2.dtype.itemsize

    if num_k == 1:
        # W fully resident as a single (constant-index -> single-buffered) block.
        bytes_per_row = 2 * D * x_item + 2 * D * out_item + 4 * D * 4
        resident = D * D * w_item + 3 * D * 4
        if rows_per_tile is None:
            rows_per_tile = _pick_rows_per_tile(rows, bytes_per_row, resident,
                                                vmem_limit_bytes)
        grid = (pl.cdiv(rows, rows_per_tile),)
        row_spec = pl.BlockSpec((rows_per_tile, D), lambda i: (i, 0))
        kernel = functools.partial(_addnorm_linear_kernel, precision=precision)
        out = pl.pallas_call(
            kernel,
            out_shape=jax.ShapeDtypeStruct((rows, D), out_dtype),
            grid_spec=pltpu.PrefetchScalarGridSpec(
                num_scalar_prefetch=0,
                grid=grid,
                in_specs=[row_spec,
                          _const_spec((D, D), lambda i: (0, 0)),
                          _const_spec((1, D), lambda i: (0, 0)),
                          _const_spec((1, D), lambda i: (0, 0)),
                          _const_spec((1, D), lambda i: (0, 0))],
                out_specs=row_spec),
            compiler_params=_compiler_params(vmem_limit_bytes, ("parallel",)),
        )(x2, W2, b2, g2, be2)
    else:
        # K-tiled fused matmul: W streamed in (tk, D) blocks, f32 accumulator
        # resident across the inner "arbitrary" K axis, residual add + LayerNorm
        # applied once at the last K step.
        # TODO(synk): also N-tile W (output columns) if tk*D blocks ever exceed
        # VMEM at extreme d_model.
        bytes_per_row = (2 * tk * x_item + 2 * D * x_item + 2 * D * out_item
                         + 4 * D * 4)
        resident = 2 * tk * D * w_item + 3 * D * 4
        if rows_per_tile is None:
            rows_per_tile = _pick_rows_per_tile(rows, bytes_per_row, resident,
                                                vmem_limit_bytes)
        grid = (pl.cdiv(rows, rows_per_tile), num_k)
        kernel = functools.partial(_addnorm_linear_ktiled_kernel,
                                   precision=precision)
        out = pl.pallas_call(
            kernel,
            out_shape=jax.ShapeDtypeStruct((rows, D), out_dtype),
            grid_spec=pltpu.PrefetchScalarGridSpec(
                num_scalar_prefetch=0,
                grid=grid,
                in_specs=[
                    pl.BlockSpec((rows_per_tile, tk), lambda i, k: (i, k)),
                    pl.BlockSpec((rows_per_tile, D), lambda i, k: (i, 0)),
                    pl.BlockSpec((tk, D), lambda i, k: (k, 0)),
                    _const_spec((1, D), lambda i, k: (0, 0)),
                    _const_spec((1, D), lambda i, k: (0, 0)),
                    _const_spec((1, D), lambda i, k: (0, 0))],
                out_specs=pl.BlockSpec((rows_per_tile, D), lambda i, k: (i, 0)),
                scratch_shapes=[pltpu.VMEM((rows_per_tile, D), jnp.float32)]),
            compiler_params=_compiler_params(vmem_limit_bytes,
                                             ("parallel", "arbitrary")),
        )(x2, x2, W2, b2, g2, be2)
    return out.reshape(B, S, D)


def addnorm_pallas(x, sub_out, gamma, beta, *,
                   rows_per_tile=None, vmem_limit_bytes=None,
                   allow_sub_input_fusion=False):
    """LayerNorm(sub_out + x) over the last dim for an arbitrary sub_layer."""
    B, S, D = x.shape
    rows = B * S
    if vmem_limit_bytes is None:
        vmem_limit_bytes = _default_vmem_limit()

    x2 = x.reshape(rows, D)
    s2 = sub_out.reshape(rows, D)
    g2 = gamma.reshape(1, D).astype(jnp.float32)
    be2 = beta.reshape(1, D).astype(jnp.float32)
    out_dtype = x.dtype

    bytes_per_row = (2 * D * (x.dtype.itemsize + sub_out.dtype.itemsize)
                     + 2 * D * out_dtype.itemsize + 3 * D * 4)
    resident = 2 * D * 4
    if rows_per_tile is None:
        rows_per_tile = _pick_rows_per_tile(rows, bytes_per_row, resident,
                                            vmem_limit_bytes)

    grid = (pl.cdiv(rows, rows_per_tile),)
    row_spec = pl.BlockSpec((rows_per_tile, D), lambda i: (i, 0))
    vec_spec = _const_spec((1, D), lambda i: (0, 0))
    # Optionally let XLA fuse an elementwise sub_layer producer directly into the
    # sub_out operand (skips its HBM round-trip).  Off by default.
    fusion = [False, True, False, False] if allow_sub_input_fusion else None

    out = pl.pallas_call(
        _addnorm_kernel,
        out_shape=jax.ShapeDtypeStruct((rows, D), out_dtype),
        grid_spec=pltpu.PrefetchScalarGridSpec(
            num_scalar_prefetch=0,
            grid=grid,
            in_specs=[row_spec, row_spec, vec_spec, vec_spec],
            out_specs=row_spec),
        compiler_params=_compiler_params(vmem_limit_bytes, ("parallel",),
                                         allow_input_fusion=fusion),
    )(x2, s2, g2, be2)
    return out.reshape(B, S, D)


def reference_addnorm(x, sub_out, gamma, beta):
    add = x.astype(jnp.float32) + sub_out.astype(jnp.float32)
    mean = jnp.mean(add, axis=-1, keepdims=True)
    var = jnp.mean((add - mean) ** 2, axis=-1, keepdims=True)
    return (add - mean) / jnp.sqrt(var + LN_EPS) * gamma + beta


if __name__ == "__main__":
    key = jax.random.PRNGKey(0)
    kx, kw, kb, kx2, kw2, kb2 = jax.random.split(key, 6)

    # ---- Case 1: d_model = 128 (lane-dense), fused + generic paths ----------
    B, S, D = 2, 8, 128
    x = jax.random.normal(kx, (B, S, D), dtype=jnp.float32)
    W = jax.random.normal(kw, (D, D), dtype=jnp.float32) * 0.02
    b = jax.random.normal(kb, (D,), dtype=jnp.float32) * 0.02
    gamma = jnp.ones((D,), dtype=jnp.float32)   # PyTorch LayerNorm init
    beta = jnp.zeros((D,), dtype=jnp.float32)

    out_fused = jax.block_until_ready(addnorm_linear_pallas(x, W, b, gamma, beta))

    sub_out = jnp.einsum("bsd,de->bse", x, W) + b
    out_generic = jax.block_until_ready(addnorm_pallas(x, sub_out, gamma, beta))

    # Generic path sees the exact same sub_out as the reference -> tight check.
    ref_generic = reference_addnorm(x, sub_out, gamma, beta)
    assert jnp.allclose(out_generic, ref_generic, atol=1e-4, rtol=1e-4), \
        "generic add+LayerNorm mismatch vs reference"

    # Fused-path reference uses the same bf16-cast weights the kernel saw; the
    # remaining slack covers MXU vs XLA default-precision matmul differences.
    W_used = W.astype(jnp.bfloat16).astype(jnp.float32)
    ref_fused = reference_addnorm(
        x, jnp.einsum("bsd,de->bse", x, W_used) + b, gamma, beta)
    assert jnp.allclose(out_fused, ref_fused, atol=1e-2, rtol=1e-2), \
        "fused Linear+AddNorm mismatch vs reference"

    # ---- Case 2: exercise the K-tiled fused path (d_model=512, k_tile=256) --
    D2 = 512
    x_big = jax.random.normal(kx2, (B, S, D2), dtype=jnp.float32)
    W_big = jax.random.normal(kw2, (D2, D2), dtype=jnp.float32) * 0.02
    b_big = jax.random.normal(kb2, (D2,), dtype=jnp.float32) * 0.02
    gamma_big = jnp.ones((D2,), dtype=jnp.float32)
    beta_big = jnp.zeros((D2,), dtype=jnp.float32)

    out_kt = jax.block_until_ready(
        addnorm_linear_pallas(x_big, W_big, b_big, gamma_big, beta_big,
                              k_tile=256))
    W_big_used = W_big.astype(jnp.bfloat16).astype(jnp.float32)
    ref_kt = reference_addnorm(
        x_big, jnp.einsum("bsd,de->bse", x_big, W_big_used) + b_big,
        gamma_big, beta_big)
    assert jnp.allclose(out_kt, ref_kt, atol=2e-2, rtol=2e-2), \
        "K-tiled fused Linear+AddNorm mismatch vs reference"

    print("KERNEL_OK")
</pallas_src>

<mosaic_0001>
module attributes {stable_mosaic.version = 11 : i64} {
  func.func @_addnorm_linear_kernel(%arg0: i32, %arg1: memref<8x128xf32, #tpu.memory_space<vmem>>, %arg2: memref<128x128xbf16, #tpu.memory_space<vmem>>, %arg3: memref<1x128xf32, #tpu.memory_space<vmem>>, %arg4: memref<1x128xf32, #tpu.memory_space<vmem>>, %arg5: memref<1x128xf32, #tpu.memory_space<vmem>>, %arg6: memref<8x128xf32, #tpu.memory_space<vmem>>) attributes {dimension_semantics = [#tpu.dimension_semantics<parallel>], iteration_bounds = array<i64: 2>, scalar_prefetch = 0 : i64, scratch_operands = 0 : i64, tpu.core_type = #tpu.core_type<tc>, window_params = [{transform_indices = @transform_0, window_bounds = array<i64: 8, 128>}, {pipeline_mode = #tpu.pipeline_mode<synchronous>, transform_indices = @transform_1, window_bounds = array<i64: 128, 128>}, {pipeline_mode = #tpu.pipeline_mode<synchronous>, transform_indices = @transform_2, window_bounds = array<i64: 1, 128>}, {pipeline_mode = #tpu.pipeline_mode<synchronous>, transform_indices = @transform_3, window_bounds = array<i64: 1, 128>}, {pipeline_mode = #tpu.pipeline_mode<synchronous>, transform_indices = @transform_4, window_bounds = array<i64: 1, 128>}, {transform_indices = @transform_5, window_bounds = array<i64: 8, 128>}]} {
    %c0 = arith.constant 0 : index
    %c0_0 = arith.constant 0 : index
    %0 = vector.load %arg1[%c0, %c0_0] : memref<8x128xf32, #tpu.memory_space<vmem>>, vector<8x128xf32>
    %c0_1 = arith.constant 0 : index
    %c0_2 = arith.constant 0 : index
    %1 = vector.load %arg2[%c0_1, %c0_2] : memref<128x128xbf16, #tpu.memory_space<vmem>>, vector<128x128xbf16>
    %cst = arith.constant dense<0.000000e+00> : vector<8x128xf32>
    %2 = tpu.matmul %0, %1, %cst {dimension_numbers = #tpu.dot_dimension_numbers<[1], [0], [0], [1], [0, 0, 1, 1], [], []>} : vector<8x128xf32>, vector<128x128xbf16>, vector<8x128xf32> -> vector<8x128xf32>
    %c0_3 = arith.constant 0 : index
    %c0_4 = arith.constant 0 : index
    %3 = vector.load %arg3[%c0_3, %c0_4] : memref<1x128xf32, #tpu.memory_space<vmem>>, vector<1x128xf32>
    %4 = vector.broadcast %3 : vector<1x128xf32> to vector<8x128xf32>
    %5 = arith.addf %2, %4 : vector<8x128xf32>
    %6 = arith.addf %5, %0 : vector<8x128xf32>
    %c0_5 = arith.constant 0 : index
    %c0_6 = arith.constant 0 : index
    %7 = vector.load %arg4[%c0_5, %c0_6] : memref<1x128xf32, #tpu.memory_space<vmem>>, vector<1x128xf32>
    %c0_7 = arith.constant 0 : index
    %c0_8 = arith.constant 0 : index
    %8 = vector.load %arg5[%c0_7, %c0_8] : memref<1x128xf32, #tpu.memory_space<vmem>>, vector<1x128xf32>
    %cst_9 = arith.constant dense<0.000000e+00> : vector<8xf32>
    %9 = vector.multi_reduction <add>, %6, %cst_9 [1] : vector<8x128xf32> to vector<8xf32>
    %10 = vector.shape_cast %9 : vector<8xf32> to vector<8x1xf32>
    %cst_10 = arith.constant 1.280000e+02 : f32
    %11 = vector.broadcast %cst_10 : f32 to vector<8x1xf32>
    %12 = arith.divf %10, %11 : vector<8x1xf32>
    %13 = vector.broadcast %12 : vector<8x1xf32> to vector<8x128xf32>
    %14 = arith.subf %6, %13 : vector<8x128xf32>
    %15 = arith.mulf %14, %14 : vector<8x128xf32>
    %cst_11 = arith.constant dense<0.000000e+00> : vector<8xf32>
    %16 = vector.multi_reduction <add>, %15, %cst_11 [1] : vector<8x128xf32> to vector<8xf32>
    %17 = vector.shape_cast %16 : vector<8xf32> to vector<8x1xf32>
    %cst_12 = arith.constant 1.280000e+02 : f32
    %18 = vector.broadcast %cst_12 : f32 to vector<8x1xf32>
    %19 = arith.divf %17, %18 : vector<8x1xf32>
    %cst_13 = arith.constant 9.99999974E-6 : f32
    %20 = vector.broadcast %cst_13 : f32 to vector<8x1xf32>
    %21 = arith.addf %19, %20 : vector<8x1xf32>
    %22 = math.rsqrt %21 : vector<8x1xf32>
    %23 = vector.broadcast %22 : vector<8x1xf32> to vector<8x128xf32>
    %24 = arith.mulf %14, %23 : vector<8x128xf32>
    %25 = vector.broadcast %7 : vector<1x128xf32> to vector<8x128xf32>
    %26 = arith.mulf %24, %25 : vector<8x128xf32>
    %27 = vector.broadcast %8 : vector<1x128xf32> to vector<8x128xf32>
    %28 = arith.addf %26, %27 : vector<8x128xf32>
    %c0_14 = arith.constant 0 : index
    %c0_15 = arith.constant 0 : index
    %29 = vector.load %arg6[%c0_14, %c0_15] : memref<8x128xf32, #tpu.memory_space<vmem>>, vector<8x128xf32>
    tpu.vector_store %arg6[%c0_14, %c0_15], %28 {strides = array<i32>} : memref<8x128xf32, #tpu.memory_space<vmem>>, vector<8x128xf32>,
    return
  }
  func.func @transform_0(%arg0: i32) -> (i32, i32) {
    %c0_i32 = arith.constant 0 : i32
    %c0_i32_0 = arith.constant 0 : i32
    return %arg0, %c0_i32 : i32, i32
  }
  func.func @transform_1(%arg0: i32) -> (i32, i32) {
    %c0_i32 = arith.constant 0 : i32
    %c0_i32_0 = arith.constant 0 : i32
    %c0_i32_1 = arith.constant 0 : i32
    return %c0_i32, %c0_i32_0 : i32, i32
  }
  func.func @transform_2(%arg0: i32) -> (i32, i32) {
    %c0_i32 = arith.constant 0 : i32
    %c0_i32_0 = arith.constant 0 : i32
    %c0_i32_1 = arith.constant 0 : i32
    return %c0_i32, %c0_i32_0 : i32, i32
  }
  func.func @transform_3(%arg0: i32) -> (i32, i32) {
    %c0_i32 = arith.constant 0 : i32
    %c0_i32_0 = arith.constant 0 : i32
    %c0_i32_1 = arith.constant 0 : i32
    return %c0_i32, %c0_i32_0 : i32, i32
  }
  func.func @transform_4(%arg0: i32) -> (i32, i32) {
    %c0_i32 = arith.constant 0 : i32
    %c0_i32_0 = arith.constant 0 : i32
    %c0_i32_1 = arith.constant 0 : i32
    return %c0_i32, %c0_i32_0 : i32, i32
  }
  func.func @transform_5(%arg0: i32) -> (i32, i32) {
    %c0_i32 = arith.constant 0 : i32
    %c0_i32_0 = arith.constant 0 : i32
    return %arg0, %c0_i32 : i32, i32
  }
}

</mosaic_0001>

<llo_original>
// kernel: tpu_custom_call.1
$region0: #{tpu_custom_call.1}
  #allocation0 [shape = 'u32[]', space=smem, size = 0x4, offset = 0x4, fixed_abs, tag = 'smem constant byte address 0x4 - core index']
  #allocation1 [shape = 'u32[144,128]{1,0:T(1,128)}', space=vmem, size = 0x12000, scoped, tag = 'internal scratch']
  %s0 = inlined_call_operand.hbm [shape: f32[16,128], index: 0, kind: input, shape index: {}]
  %s1 = inlined_call_operand.hbm [shape: bf16[128,128], index: 1, kind: input, shape index: {}]
  %s2 = inlined_call_operand.vmem [shape: f32[1,128], index: 2, kind: input, shape index: {}]
  %s3 = inlined_call_operand.vmem [shape: f32[1,128], index: 3, kind: input, shape index: {}]
  %s4 = inlined_call_operand.vmem [shape: f32[1,128], index: 4, kind: input, shape index: {}]
  %s5 = inlined_call_operand.hbm [shape: f32[16,128], index: 5, kind: output, shape index: {}]
  %s6 = sld [smem:[#allocation0]]
  $region61: #{tpu_custom_call.1} parent=0
    _
  %s8 = ssub.s32 1, %s6
  %s9 = scalar_select 0, %s8, %s6
  $region1: #{tpu_custom_call.1} parent=0
    #allocation2 [shape = 'u8[8192]{0}', space=vmem, size = 0x2000, scoped, tag = 'input window, operand 0']
    #allocation3 [shape = 's32[2]{0}', space=sflag, size = 0x8, scoped, tag = 'scoped memory for tpu_custom_call.1']
    #allocation4 [shape = 's32[2]{0}', space=sflag, size = 0x8, scoped, tag = 'scoped memory for tpu_custom_call.1']
    #allocation5 [shape = 'u8[32768]{0}', space=vmem, size = 0x8000, scoped, tag = 'input window, operand 1, single buffered']
    #allocation6 [shape = 's32[1]{0}', space=sflag, size = 0x4, scoped, tag = 'scoped memory for tpu_custom_call.1']
    #allocation7 [shape = 'u8[8192]{0}', space=vmem, size = 0x2000, scoped, tag = 'output window, operand 0']
    %10 = vsyncpa [#allocation3], 0
    %s11 = scalar_lea.sflag [#allocation3], 1
    %12 = vsyncpa %s11, 0
    %13 = vsyncpa [#allocation6], 0
    %14 = vsyncpa [#allocation4], 0
    %s15 = scalar_lea.sflag [#allocation4], 1
    %16 = vsyncpa %s15, 0
    loop: start=0, step=1, limit=4
    $region2: #{tpu_custom_call.1} parent=1 // loop_pre_header
      _
    $region3: #{tpu_custom_call.1} parent=1 // loop_header
      %s18 = sphi 0, %s22
      %p19 = scmp.ge.s32.totalorder %s18, 4
      %s28 = sphi 0, %s30
      %s31 = sphi 0, %s28
      %s32 = sphi 0, %s31
      %s48 = sphi 0, %s32
      %s52 = sphi 0, %s52
      %s54 = sphi 0, %s52
      %s55 = sphi 0, %s54
      %s69 = sphi 0, %s55
      %s73 = sphi 0, %s73
      %s75 = sphi 0, %s73
      %s76 = sphi 0, %s75
      %s90 = sphi 0, %s76
      %s94 = sphi 0, %s94
      %s96 = sphi 0, %s94
      %s97 = sphi 0, %s96
      %s111 = sphi 0, %s97
      %s115 = sphi 0, %s115
      %s117 = sphi 0, %s115
      %s118 = sphi 0, %s117
      %s132 = sphi 0, %s118
      %s138 = sphi 0, %s140
      %s141 = sphi 0, %s138
      %s142 = sphi 0, %s141
      %s158 = sphi 0, %s142
    $region4: #{tpu_custom_call.1} parent=1 // loop_header_branch
      %21 = sbr.rel (%p19) target = $region8
    $region5: #{tpu_custom_call.1} parent=1 // loop_body
      %s23 = ssub.s32 %s18, 1
      %s24 = ssub.s32 %s18, 2
      %s25 = sadd.s32 %s18, 1
      %s26 = ssub.s32 %s18, %s25
      %p27 = scmp.eq.s32.totalorder %s26, 0
      %s29 = sadd.s32 %s28, 1
      %s30 = scalar_select %p27, %s28, %s29
      %p33 = pneg %p27
      %p34 = scmp.eq.s32.totalorder %s18, 1
      %p35 = por %p33, %p34
      %p36 = scmp.ne.s32.totalorder %s28, %s31
      %p37 = scmp.eq.s32.totalorder %s18, 0
      %p38 = por %p36, %p37
      %p39 = scmp.ne.s32.totalorder %s28, %s31
      %p40 = scmp.eq.s32.totalorder %s23, 1
      %p41 = por %p39, %p40
      %p42 = scmp.ne.s32.totalorder %s31, %s32
      %p43 = scmp.eq.s32.totalorder %s23, 0
      %p44 = por %p42, %p43
      %p45 = scmp.ne.s32.totalorder %s31, %s32
      %p46 = scmp.eq.s32.totalorder %s24, 1
      %p47 = por %p45, %p46
      %p49 = scmp.ne.s32.totalorder %s32, %s48
      %p50 = scmp.eq.s32.totalorder %s24, 0
      %p51 = por %p49, %p50
      %s53 = sadd.s32 %s52, 1
      %p56 = scmp.eq.s32.totalorder %s18, 1
      %p57 = scmp.ne.s32.totalorder %s52, %s54
      %p58 = scmp.eq.s32.totalorder %s18, 0
      %p59 = por %p57, %p58
      %p60 = scmp.ne.s32.totalorder %s52, %s54
      %p61 = scmp.eq.s32.totalorder %s23, 1
      %p62 = por %p60, %p61
      %p63 = scmp.ne.s32.totalorder %s54, %s55
      %p64 = scmp.eq.s32.totalorder %s23, 0
      %p65 = por %p63, %p64
      %p66 = scmp.ne.s32.totalorder %s54, %s55
      %p67 = scmp.eq.s32.totalorder %s24, 1
      %p68 = por %p66, %p67
      %p70 = scmp.ne.s32.totalorder %s55, %s69
      %p71 = scmp.eq.s32.totalorder %s24, 0
      %p72 = por %p70, %p71
      %s74 = sadd.s32 %s73, 1
      %p77 = scmp.eq.s32.totalorder %s18, 1
      %p78 = scmp.ne.s32.totalorder %s73, %s75
      %p79 = scmp.eq.s32.totalorder %s18, 0
      %p80 = por %p78, %p79
      %p81 = scmp.ne.s32.totalorder %s73, %s75
      %p82 = scmp.eq.s32.totalorder %s23, 1
      %p83 = por %p81, %p82
      %p84 = scmp.ne.s32.totalorder %s75, %s76
      %p85 = scmp.eq.s32.totalorder %s23, 0
      %p86 = por %p84, %p85
      %p87 = scmp.ne.s32.totalorder %s75, %s76
      %p88 = scmp.eq.s32.totalorder %s24, 1
      %p89 = por %p87, %p88
      %p91 = scmp.ne.s32.totalorder %s76, %s90
      %p92 = scmp.eq.s32.totalorder %s24, 0
      %p93 = por %p91, %p92
      %s95 = sadd.s32 %s94, 1
      %p98 = scmp.eq.s32.totalorder %s18, 1
      %p99 = scmp.ne.s32.totalorder %s94, %s96
      %p100 = scmp.eq.s32.totalorder %s18, 0
      %p101 = por %p99, %p100
      %p102 = scmp.ne.s32.totalorder %s94, %s96
      %p103 = scmp.eq.s32.totalorder %s23, 1
      %p104 = por %p102, %p103
      %p105 = scmp.ne.s32.totalorder %s96, %s97
      %p106 = scmp.eq.s32.totalorder %s23, 0
      %p107 = por %p105, %p106
      %p108 = scmp.ne.s32.totalorder %s96, %s97
      %p109 = scmp.eq.s32.totalorder %s24, 1
      %p110 = por %p108, %p109
      %p112 = scmp.ne.s32.totalorder %s97, %s111
      %p113 = scmp.eq.s32.totalorder %s24, 0
      %p114 = por %p112, %p113
      %s116 = sadd.s32 %s115, 1
      %p119 = scmp.eq.s32.totalorder %s18, 1
      %p120 = scmp.ne.s32.totalorder %s115, %s117
      %p121 = scmp.eq.s32.totalorder %s18, 0
      %p122 = por %p120, %p121
      %p123 = scmp.ne.s32.totalorder %s115, %s117
      %p124 = scmp.eq.s32.totalorder %s23, 1
      %p125 = por %p123, %p124
      %p126 = scmp.ne.s32.totalorder %s117, %s118
      %p127 = scmp.eq.s32.totalorder %s23, 0
      %p128 = por %p126, %p127
      %p129 = scmp.ne.s32.totalorder %s117, %s118
      %p130 = scmp.eq.s32.totalorder %s24, 1
      %p131 = por %p129, %p130
      %p133 = scmp.ne.s32.totalorder %s118, %s132
      %p134 = scmp.eq.s32.totalorder %s24, 0
      %p135 = por %p133, %p134
      %s136 = ssub.s32 %s18, %s25
      %p137 = scmp.eq.s32.totalorder %s136, 0
      %s139 = sadd.s32 %s138, 1
      %s140 = scalar_select %p137, %s138, %s139
      %p143 = pneg %p137
      %p144 = scmp.eq.s32.totalorder %s18, 1
      %p145 = por %p143, %p144
      %p146 = scmp.ne.s32.totalorder %s138, %s141
      %p147 = scmp.eq.s32.totalorder %s18, 0
      %p148 = por %p146, %p147
      %p149 = scmp.ne.s32.totalorder %s138, %s141
      %p150 = scmp.eq.s32.totalorder %s23, 1
      %p151 = por %p149, %p150
      %p152 = scmp.ne.s32.totalorder %s141, %s142
      %p153 = scmp.eq.s32.totalorder %s23, 0
      %p154 = por %p152, %p153
      %p155 = scmp.ne.s32.totalorder %s141, %s142
      %p156 = scmp.eq.s32.totalorder %s24, 1
      %p157 = por %p155, %p156
      %p159 = scmp.ne.s32.totalorder %s142, %s158
      %p160 = scmp.eq.s32.totalorder %s24, 0
      %p161 = por %p159, %p160
      %p162 = scmp.le.s32.totalorder 1, %s18
      %p163 = scmp.lt.s32.totalorder %s18, 3
      %p164 = pnand %p162, %p163
      %p165 = pneg %p164
      // Predicated region
      $region9: #{tpu_custom_call.1} parent=5 // pred_check
        _
      $region10: #{tpu_custom_call.1} parent=5 // pred_check_branch
        %167 = sbr.rel (%p164) target = $region12
      $region11: #{tpu_custom_call.1} parent=5 // pred_region
        %s168 = ssub.s32 %s18, 1
        // Predicated region
        $region13: #{tpu_custom_call.1} parent=11 // pred_check
          %p169 = pneg %p65
        $region14: #{tpu_custom_call.1} parent=11 // pred_check_branch
          %171 = sbr.rel (%p169) target = $region16
        $region15: #{tpu_custom_call.1} parent=11 // pred_region
          %s173 = ssub.s32 1024, 1024
          %174 = vsyncadd [#allocation6], %s173
          %s175 = sshll.u32 [#allocation5], 4
          %s176 = int_to_ptr.vmem [resolvable:$true] %s175
          %181 = dma.hbm_to_vmem [thread:$0]  %s1, 1024, %s176, [#allocation6], 64, 64, 4
        $region16: #{tpu_custom_call.1} parent=11 // pred_fallthru
          _
        // Predicated region
        $region17: #{tpu_custom_call.1} parent=11 // pred_check
          %p182 = pneg %p86
        $region18: #{tpu_custom_call.1} parent=11 // pred_check_branch
          %184 = sbr.rel (%p182) target = $region20
        $region19: #{tpu_custom_call.1} parent=11 // pred_region
          _
        $region20: #{tpu_custom_call.1} parent=11 // pred_fallthru
          _
        // Predicated region
        $region21: #{tpu_custom_call.1} parent=11 // pred_check
          %p185 = pneg %p107
        $region22: #{tpu_custom_call.1} parent=11 // pred_check_branch
          %187 = sbr.rel (%p185) target = $region24
        $region23: #{tpu_custom_call.1} parent=11 // pred_region
          _
        $region24: #{tpu_custom_call.1} parent=11 // pred_fallthru
          _
        // Predicated region
        $region25: #{tpu_custom_call.1} parent=11 // pred_check
          %p188 = pneg %p128
        $region26: #{tpu_custom_call.1} parent=11 // pred_check_branch
          %190 = sbr.rel (%p188) target = $region28
        $region27: #{tpu_custom_call.1} parent=11 // pred_region
          _
        $region28: #{tpu_custom_call.1} parent=11 // pred_fallthru
          _
      $region12: #{tpu_custom_call.1} parent=5 // pred_fallthru
        _
      %p191 = scmp.lt.s32.totalorder %s18, 2
      // Predicated region
      $region29: #{tpu_custom_call.1} parent=5 // pred_check
        %p192 = pneg %p191
      $region30: #{tpu_custom_call.1} parent=5 // pred_check_branch
        %194 = sbr.rel (%p192) target = $region32
      $region31: #{tpu_custom_call.1} parent=5 // pred_region
        // Predicated region
        $region33: #{tpu_custom_call.1} parent=31 // pred_check
          %p195 = pneg %p38
        $region34: #{tpu_custom_call.1} parent=31 // pred_check_branch
          %197 = sbr.rel (%p195) target = $region36
        $region35: #{tpu_custom_call.1} parent=31 // pred_region
          %s198 = sand.u32 %s28, 1
          %s199 = scalar_lea.sflag [#allocation3], %s198
          %s200 = sand.u32 %s28, 1
          %s201 = smul.addr %s200, 8
          %s202 = scalar_lea.vmem [#allocation2], %s201
          %s204 = ssub.s32 128, 128
          %205 = vsyncadd %s199, %s204
          %s206 = smul.addr %s18, 128
          %s207 = scalar_lea.hbm %s0, %s206
          %s209 = sshll.u32 %s202, 4
          %s210 = int_to_ptr.vmem [resolvable:$true] %s209
          %212 = dma.hbm_to_vmem [thread:$0]  %s207, 128, %s210, %s199
        $region36: #{tpu_custom_call.1} parent=31 // pred_fallthru
          _
      $region32: #{tpu_custom_call.1} parent=5 // pred_fallthru
        _
      %p213 = scmp.le.s32.totalorder 1, %s18
      %p214 = scmp.lt.s32.totalorder %s18, 3
      %p215 = pnand %p213, %p214
      %p216 = pneg %p215
      // Predicated region
      $region37: #{tpu_custom_call.1} parent=5 // pred_check
        _
      $region38: #{tpu_custom_call.1} parent=5 // pred_check_branch
        %218 = sbr.rel (%p215) target = $region40
      $region39: #{tpu_custom_call.1} parent=5 // pred_region
        %s219 = ssub.s32 %s18, 1
        %s220 = sand.u32 %s31, 1
        %s221 = scalar_lea.sflag [#allocation3], %s220
        %s222 = sand.u32 %s31, 1
        %s223 = smul.addr %s222, 8
        %s224 = scalar_lea.vmem [#allocation2], %s223
        // Predicated region
        $region41: #{tpu_custom_call.1} parent=39 // pred_check
          %p225 = pneg %p44
        $region42: #{tpu_custom_call.1} parent=39 // pred_check_branch
          %227 = sbr.rel (%p225) target = $region44
        $region43: #{tpu_custom_call.1} parent=39 // pred_region
          %228 = dma.done %s221, 128
        $region44: #{tpu_custom_call.1} parent=39 // pred_fallthru
          _
        // Predicated region
        $region45: #{tpu_custom_call.1} parent=39 // pred_check
          %p229 = pneg %p65
        $region46: #{tpu_custom_call.1} parent=39 // pred_check_branch
          %231 = sbr.rel (%p229) target = $region48
        $region47: #{tpu_custom_call.1} parent=39 // pred_region
          %232 = dma.done [#allocation6], 1024
        $region48: #{tpu_custom_call.1} parent=39 // pred_fallthru
          _
        %s233 = sand.u32 %s31, 1
        %s234 = scalar_lea.sflag [#allocation3], %s233
        %s235 = sand.u32 %s31, 1
        %s236 = smul.addr %s235, 8
        %s237 = scalar_lea.vmem [#allocation2], %s236
        %p238 = pneg %p44
        %p239 = pneg %p41
        %p240 = pneg %p65
        %p241 = pneg %p62
        %p242 = pneg %p86
        %p243 = pneg %p83
        %p244 = pneg %p107
        %p245 = pneg %p104
        %p246 = pneg %p128
        %p247 = pneg %p125
        %p248 = pneg %p154
        %p249 = pneg %p151
        %s250 = sand.u32 %s141, 1
        %s251 = scalar_lea.sflag [#allocation4], %s250
        %s252 = sand.u32 %s141, 1
        %s253 = smul.addr %s252, 8
        %s254 = scalar_lea.vmem [#allocation7], %s253
        %v256 = vld [vmem:[%s224] sm:$0xff]
        %v257 = vld [vmem:[#allocation5] sm:$0xf]
        %v258 = vld [vmem:[#allocation5 + $0x4] sm:$0xf]
        %v259 = vld [vmem:[#allocation5 + $0x8] sm:$0xf]
        %v260 = vld [vmem:[#allocation5 + $0xc] sm:$0xf]
        %v261 = vld [vmem:[#allocation5 + $0x10] sm:$0xf]
        %v262 = vld [vmem:[#allocation5 + $0x14] sm:$0xf]
        %v263 = vld [vmem:[#allocation5 + $0x18] sm:$0xf]
        %v264 = vld [vmem:[#allocation5 + $0x1c] sm:$0xf]
        %v265 = vld [vmem:[#allocation5 + $0x20] sm:$0xf]
        %v266 = vld [vmem:[#allocation5 + $0x24] sm:$0xf]
        %v267 = vld [vmem:[#allocation5 + $0x28] sm:$0xf]
        %v268 = vld [vmem:[#allocation5 + $0x2c] sm:$0xf]
        %v269 = vld [vmem:[#allocation5 + $0x30] sm:$0xf]
        %v270 = vld [vmem:[#allocation5 + $0x34] sm:$0xf]
        %v271 = vld [vmem:[#allocation5 + $0x38] sm:$0xf]
        %v272 = vld [vmem:[#allocation5 + $0x3c] sm:$0xf]
        %v273 = vld [vmem:[%s2] sm:$0x1]
        %v275 = vlaneseq
        %v276 = vshrl.u32 %v275, 7
        %v277 = vsub.s32 0, %v276
        %v278 = vrot.slane %v273, %v277
        %v296 = vunpack.c.l.b16 %v257
        %v297 = vunpack.c.l.b16 %v258
        %v298 = vunpack.c.l.b16 %v259
        %v299 = vunpack.c.l.b16 %v260
        %v300 = vunpack.c.l.b16 %v261
        %v301 = vunpack.c.l.b16 %v262
        %v302 = vunpack.c.l.b16 %v263
        %v303 = vunpack.c.l.b16 %v264
        %v304 = vunpack.c.l.b16 %v265
        %v305 = vunpack.c.l.b16 %v266
        %v306 = vunpack.c.l.b16 %v267
        %v307 = vunpack.c.l.b16 %v268
        %v308 = vunpack.c.l.b16 %v269
        %v309 = vunpack.c.l.b16 %v270
        %v310 = vunpack.c.l.b16 %v271
        %v311 = vunpack.c.l.b16 %v272
        %v312 = vpack.c.b16 %v297, %v296
        %v313 = vpack.c.b16 %v299, %v298
        %v314 = vpack.c.b16 %v301, %v300
        %v315 = vpack.c.b16 %v303, %v302
        %v316 = vpack.c.b16 %v305, %v304
        %v317 = vpack.c.b16 %v307, %v306
        %v318 = vpack.c.b16 %v309, %v308
        %v319 = vpack.c.b16 %v311, %v310
        %328 = vmatprep.subr.bf16.mxu0 0
        %329 = vmatpush1.bf16.msra.mxu0 %v312
        %330 = vmatprep.subr.bf16.mxu0 0
        %331 = vmatpush1.bf16.msra.mxu0 %v313
        %332 = vmatprep.subr.bf16.mxu0 0
        %333 = vmatpush1.bf16.msra.mxu0 %v314
        %334 = vmatprep.subr.bf16.mxu0 0
        %335 = vmatpush1.bf16.msra.mxu0 %v315
        %336 = vmatprep.subr.bf16.mxu0 0
        %337 = vmatpush1.bf16.msra.mxu0 %v316
        %338 = vmatprep.subr.bf16.mxu0 0
        %339 = vmatpush1.bf16.msra.mxu0 %v317
        %340 = vmatprep.subr.bf16.mxu0 0
        %341 = vmatpush1.bf16.msra.mxu0 %v318
        %342 = vmatprep.subr.bf16.mxu0 0
        %343 = vmatpush1.bf16.msra.mxu0 %v319
        %344 = vmatprep.subr.bf16.mxu0 0
        %345 = vmatpush1.bf16.msra.mxu0 0
        %346 = vmatprep.subr.bf16.mxu0 0
        %347 = vmatpush1.bf16.msra.mxu0 0
        %348 = vmatprep.subr.bf16.mxu0 0
        %349 = vmatpush1.bf16.msra.mxu0 0
        %350 = vmatprep.subr.bf16.mxu0 0
        %351 = vmatpush1.bf16.msra.mxu0 0
        %352 = vmatprep.subr.bf16.mxu0 0
        %353 = vmatpush1.bf16.msra.mxu0 0
        %354 = vmatprep.subr.bf16.mxu0 0
        %355 = vmatpush1.bf16.msra.mxu0 0
        %356 = vmatprep.subr.bf16.mxu0 0
        %357 = vmatpush1.bf16.msra.mxu0 0
        %358 = vmatprep.subr.bf16.mxu0 0
        %359 = vmatpush1.bf16.msra.mxu0 0
        %360 = vmatprep.mubr.f32.mxu0 0.0
        %361 = vmatmul.mubr.f32.gmra.mrb[0].mxu0 %v256
        %v362 = vpop.f32.mrb[0].mxu0
        %v363 = vadd.f32 %v278, %v362
        %v364 = vpop.f32.mrb[0].mxu0
        %365 = vdwg.mxu0
        %v366 = vadd.f32 %v363, %v256
        %v367 = vld [vmem:[%s3] sm:$0x1]
        %v368 = vld [vmem:[%s4] sm:$0x1]
        %369 = vadd.xlane.f32.xlu0 %v366
        %v370 = vpop.xlane.xlu0 %369
        %v371 = vrcp.pop 128.0
        %v372 = vmul.f32 %v370, %v371
        %v373 = vsub.f32 %v366, %v372
        %v374 = vmul.f32 %v373, %v373
        %375 = vadd.xlane.f32.xlu0 %v374
        %v376 = vpop.xlane.xlu0 %375
        %v377 = vmul.f32 %v376, %v371
        %v378 = vadd.f32 %v377, 1e-05
        %v379 = vrsqrt.pop %v378
        %v380 = vmul.f32 %v373, %v379
        %v382 = vlaneseq
        %v383 = vshrl.u32 %v382, 7
        %v384 = vsub.s32 0, %v383
        %v385 = vrot.slane %v367, %v384
        %v387 = vmul.f32 %v380, %v385
        %v389 = vlaneseq
        %v390 = vshrl.u32 %v389, 7
        %v391 = vsub.s32 0, %v390
        %v392 = vrot.slane %v368, %v391
        %v394 = vadd.f32 %v387, %v392
        %395 = vst [vmem:[%s254] sm:$0xff] %v394
        %s396 = sand.u32 %s141, 1
        %s397 = scalar_lea.sflag [#allocation4], %s396
        %s398 = sand.u32 %s141, 1
        %s399 = smul.addr %s398, 8
        %s400 = scalar_lea.vmem [#allocation7], %s399
        // Predicated region
        $region49: #{tpu_custom_call.1} parent=39 // pred_check
          %p401 = pneg %p151
        $region50: #{tpu_custom_call.1} parent=39 // pred_check_branch
          %403 = sbr.rel (%p401) target = $region52
        $region51: #{tpu_custom_call.1} parent=39 // pred_region
          %s405 = ssub.s32 128, 128
          %406 = vsyncadd %s397, %s405
          %s407 = smul.addr %s23, 128
          %s408 = scalar_lea.hbm %s5, %s407
          %s410 = sshll.u32 %s400, 4
          %s411 = int_to_ptr.vmem [resolvable:$true] %s410
          %413 = dma.vmem_to_hbm [thread:$0]  %s411, 128, %s408, %s397
        $region52: #{tpu_custom_call.1} parent=39 // pred_fallthru
          _
      $region40: #{tpu_custom_call.1} parent=5 // pred_fallthru
        _
      %p414 = scmp.le.s32.totalorder 2, %s18
      // Predicated region
      $region53: #{tpu_custom_call.1} parent=5 // pred_check
        %p415 = pneg %p414
      $region54: #{tpu_custom_call.1} parent=5 // pred_check_branch
        %417 = sbr.rel (%p415) target = $region56
      $region55: #{tpu_custom_call.1} parent=5 // pred_region
        %s418 = ssub.s32 %s18, 2
        // Predicated region
        $region57: #{tpu_custom_call.1} parent=55 // pred_check
          %p419 = pneg %p157
        $region58: #{tpu_custom_call.1} parent=55 // pred_check_branch
          %421 = sbr.rel (%p419) target = $region60
        $region59: #{tpu_custom_call.1} parent=55 // pred_region
          %s422 = sand.u32 %s142, 1
          %s423 = scalar_lea.sflag [#allocation4], %s422
          %s424 = sand.u32 %s142, 1
          %s425 = smul.addr %s424, 8
          %s426 = scalar_lea.vmem [#allocation7], %s425
          %427 = dma.done %s423, 128
        $region60: #{tpu_custom_call.1} parent=55 // pred_fallthru
          _
      $region56: #{tpu_custom_call.1} parent=5 // pred_fallthru
        _
    $region6: #{tpu_custom_call.1} parent=1 // loop_footer
      %s22 = sadd.s32 1, %s18
    $region7: #{tpu_custom_call.1} parent=1 // loop_footer_branch
      %17 = sbr.rel target = $region3
    $region8: #{tpu_custom_call.1} parent=1 // loop_exit
      _
    %428 = vsyncpa [#allocation3], 1
    %s429 = scalar_lea.sflag [#allocation3], 1
    %430 = vsyncpa %s429, 1
    %431 = vsyncpa [#allocation6], 1
    %432 = vsyncpa [#allocation4], 1
    %s433 = scalar_lea.sflag [#allocation4], 1
    %434 = vsyncpa %s433, 1

</llo_original>
